<compile_context>
chip_gen: v7x
topology: tpu7x:2x2x1
jax: 0.10.0
libtpu: 0.0.40
codegen_flags: <defaults>
</compile_context>

<pallas_src>
import numpy as np
import jax
import jax.numpy as jnp
from jax import lax
from jax.experimental import pallas as pl
from jax.experimental.pallas import tpu as pltpu


# ----------------------------------------------------------------------------
# Host-side constant builders (computed once per shape; tiny)
# ----------------------------------------------------------------------------
def _bilinear_matrix(in_size: int, out_size: int) -> np.ndarray:
    """A[o, i] s.t. out[o] = sum_i A[o, i] * in[i]   (align_corners=True)."""
    A = np.zeros((out_size, in_size), dtype=np.float32)
    if in_size == 1 or out_size == 1:
        A[:, 0] = 1.0
        return A
    scale = (in_size - 1) / (out_size - 1)
    for o in range(out_size):
        src = o * scale
        i0 = min(int(np.floor(src)), in_size - 1)
        i1 = min(i0 + 1, in_size - 1)
        w1 = src - i0
        A[o, i0] += 1.0 - w1
        A[o, i1] += w1
    return A


def _upsample_pad_matrix(H1, W1, OH, OW, H2, W2, py0, px0) -> np.ndarray:
    """Mk[h*W1+w, Y*W2+X]: bilinear upsample (align_corners=True) to (OH,OW)
    followed by F.pad placement at offset (py0,px0) inside an (H2,W2) canvas.
    Negative offsets (crop) behave like torch F.pad with negative pads."""
    Ah = _bilinear_matrix(H1, OH)                       # (OH, H1)
    Aw = _bilinear_matrix(W1, OW)                       # (OW, W1)
    Hm = np.zeros((H2, H1), dtype=np.float32)
    for Y in range(H2):
        r = Y - py0
        if 0 <= r < OH:
            Hm[Y] = Ah[r]
    Wm = np.zeros((W2, W1), dtype=np.float32)
    for X in range(W2):
        c = X - px0
        if 0 <= c < OW:
            Wm[X] = Aw[c]
    M = np.einsum("yh,xw->hwyx", Hm, Wm).reshape(H1 * W1, H2 * W2)
    return np.ascontiguousarray(M, dtype=np.float32)


def _pack_conv_weight(w) -> jnp.ndarray:
    """OIHW (Cout, Cin, 3, 3) -> (Cout, 9*Cin), column index = (kh*3+kw)*Cin+ci."""
    Cout, Cin = w.shape[0], w.shape[1]
    return jnp.transpose(w, (0, 2, 3, 1)).reshape(Cout, 9 * Cin)


def _edge_masks(H2, W2) -> np.ndarray:
    """Row 0 kills x==0 columns (kw=0 taps), row 1 kills x==W2-1 (kw=2 taps)."""
    x = np.arange(H2 * W2) % W2
    m = np.ones((2, H2 * W2), dtype=np.float32)
    m[0, x == 0] = 0.0
    m[1, x == W2 - 1] = 0.0
    return m


# ----------------------------------------------------------------------------
# Fused kernel: upsample + pad + concat + 3x3 conv + ReLU (one grid step / image)
# ----------------------------------------------------------------------------
def _make_up_kernel(C1, C2, W2, N2, OFF, L):
    Cin = C1 + C2
    has_skip = C2 > 0
    base = OFF - W2 - 1          # slab(kh,kw) start = base + kh*W2 + kw

    def kernel(*refs):
        if has_skip:
            x1f_ref, x2f_ref, mk_ref, wmat_ref, mask_ref, o_ref, xf_ref = refs
        else:
            x1f_ref, mk_ref, wmat_ref, mask_ref, o_ref, xf_ref = refs

        # (1) bilinear upsample + spatial pad placement as ONE MXU matmul,
        #     producing the x1 channels already in flat lane-dense layout.
        up = jnp.dot(x1f_ref[0].astype(jnp.float32), mk_ref[...],
                     preferred_element_type=jnp.float32)             # (C1, N2)

        # (2) assemble the row-padded, channel-concatenated image in VMEM.
        #     Interior lives at lane offset OFF (128-aligned); pads are zeros.
        xf_ref[...] = jnp.zeros((Cin, L), jnp.float32)
        if has_skip:
            xf_ref[0:C2, OFF:OFF + N2] = x2f_ref[0].astype(jnp.float32)
        xf_ref[C2:Cin, OFF:OFF + N2] = up

        # (3) 3x3 conv + ReLU as ONE (Cout, 9*Cin) @ (9*Cin, N2) MXU matmul.
        #     The 9 taps are lane-shifted views of the flat image; column
        #     wrap-around of the flat layout is zeroed by precomputed masks.
        xf = xf_ref[...]                                              # (Cin, L)
        mask_l = mask_ref[0:1, :]                                     # (1, N2)
        mask_r = mask_ref[1:2, :]
        slabs = []
        for kh in range(3):
            for kw in range(3):
                start = base + kh * W2 + kw
                s = xf[:, start:start + N2]                           # (Cin, N2)
                if kw == 0:
                    s = s * mask_l
                elif kw == 2:
                    s = s * mask_r
                slabs.append(s)
        patches = jnp.concatenate(slabs, axis=0)                      # (9*Cin, N2)
        # NOTE: at larger channel counts, cast patches/wmat to bf16 here for
        # full MXU rate (keep f32 accumulation); f32 is exact enough at Cin=8.
        y = jnp.dot(wmat_ref[...], patches,
                    preferred_element_type=jnp.float32)               # (Cout, N2)
        o_ref[0] = jnp.maximum(y, 0.0).astype(o_ref.dtype)            # lane-dense

    return kernel


def up_forward(conv_w, x1, x2=None, scale=2):
    """Fused Pallas implementation of Up.forward (bilinear=True path)."""
    B, C1, H1, W1 = x1.shape
    OH, OW = H1 * scale, W1 * scale
    if x2 is not None:
        C2, H2, W2 = x2.shape[1], x2.shape[2], x2.shape[3]
        py0 = (H2 - OH) // 2
        px0 = (W2 - OW) // 2
    else:
        C2, H2, W2 = 0, OH, OW
        py0 = px0 = 0
    Cin = C1 + C2
    Cout = conv_w.shape[0]
    assert conv_w.shape == (Cout, Cin, 3, 3), conv_w.shape

    N2 = H2 * W2
    OFF = ((W2 + 1 + 127) // 128) * 128      # 128-aligned interior offset
    L = OFF + N2 + OFF                        # flat padded image length

    mk = jnp.asarray(_upsample_pad_matrix(H1, W1, OH, OW, H2, W2, py0, px0))
    wmat = _pack_conv_weight(conv_w.astype(jnp.float32))
    emask = jnp.asarray(_edge_masks(H2, W2))

    x1f = x1.reshape(B, C1, H1 * W1)          # contiguous dim-merge: free
    kernel = _make_up_kernel(C1, C2, W2, N2, OFF, L)

    in_specs = [pl.BlockSpec((1, C1, H1 * W1), lambda b: (b, 0, 0))]
    args = [x1f]
    if x2 is not None:
        x2f = x2.reshape(B, C2, N2)           # free
        in_specs.append(pl.BlockSpec((1, C2, N2), lambda b: (b, 0, 0)))
        args.append(x2f)
    in_specs += [
        pl.BlockSpec((H1 * W1, N2), lambda b: (0, 0)),    # Mk (resident)
        pl.BlockSpec((Cout, 9 * Cin), lambda b: (0, 0)),  # packed conv weight
        pl.BlockSpec((2, N2), lambda b: (0, 0)),          # edge masks
    ]
    args += [mk, wmat, emask]

    out_flat = pl.pallas_call(
        kernel,
        out_shape=jax.ShapeDtypeStruct((B, Cout, N2), x1.dtype),
        grid_spec=pltpu.PrefetchScalarGridSpec(
            num_scalar_prefetch=0,
            grid=(B,),
            in_specs=in_specs,
            out_specs=pl.BlockSpec((1, Cout, N2), lambda b: (b, 0, 0)),
            scratch_shapes=[pltpu.VMEM((Cin, L), jnp.float32)],
        ),
        compiler_params=pltpu.CompilerParams(
            dimension_semantics=("parallel",),
        ),
    )(*args)
    return out_flat.reshape(B, Cout, H2, W2)  # free reshape back to NCHW


# ----------------------------------------------------------------------------
# Pure-JAX reference (correctness check)
# ----------------------------------------------------------------------------
def up_forward_ref(conv_w, x1, x2=None, scale=2):
    B, C, H, W = x1.shape
    ah = jnp.asarray(_bilinear_matrix(H, H * scale))
    aw = jnp.asarray(_bilinear_matrix(W, W * scale))
    x1u = jnp.einsum("oh,bchw->bcow", ah, x1)
    x1u = jnp.einsum("pw,bcow->bcop", aw, x1u)
    if x2 is not None:
        diffY = x2.shape[2] - x1u.shape[2]
        diffX = x2.shape[3] - x1u.shape[3]
        x1u = jnp.pad(
            x1u,
            ((0, 0), (0, 0),
             (diffY // 2, diffY - diffY // 2),
             (diffX // 2, diffX - diffX // 2)),
        )
        x = jnp.concatenate([x2, x1u], axis=1)
    else:
        x = x1u
    y = lax.conv_general_dilated(
        x, conv_w, window_strides=(1, 1), padding=((1, 1), (1, 1)),
        dimension_numbers=("NCHW", "OIHW", "NCHW"))
    return jnp.maximum(y, 0.0)


if __name__ == "__main__":
    key = jax.random.PRNGKey(0)
    k1, k2, k3, k4 = jax.random.split(key, 4)

    # Up(in_channels=8, out_channels=4, bilinear=True, skip=True, scale=2)
    B, C1, H1, W1 = 2, 4, 8, 8        # x1 (low-res decoder feature)
    C2, H2, W2 = 4, 16, 16            # x2 (skip connection)
    in_ch, out_ch = C1 + C2, 4

    x1 = jax.random.normal(k1, (B, C1, H1, W1), dtype=jnp.float32)
    x2 = jax.random.normal(k2, (B, C2, H2, W2), dtype=jnp.float32)
    conv_w = jax.random.normal(k3, (out_ch, in_ch, 3, 3), dtype=jnp.float32) * 0.1

    # skip path (default)
    out = jax.block_until_ready(up_forward(conv_w, x1, x2, scale=2))
    ref = up_forward_ref(conv_w, x1, x2, scale=2)
    assert out.shape == (B, out_ch, H2, W2), out.shape
    np.testing.assert_allclose(np.asarray(out), np.asarray(ref), rtol=1e-4, atol=1e-4)

    # no-skip path (x2 is None)
    conv_w_ns = jax.random.normal(k4, (out_ch, C1, 3, 3), dtype=jnp.float32) * 0.1
    out_ns = jax.block_until_ready(up_forward(conv_w_ns, x1, None, scale=2))
    ref_ns = up_forward_ref(conv_w_ns, x1, None, scale=2)
    assert out_ns.shape == (B, out_ch, H1 * 2, W1 * 2), out_ns.shape
    np.testing.assert_allclose(np.asarray(out_ns), np.asarray(ref_ns),
                               rtol=1e-4, atol=1e-4)

    print("KERNEL_OK")
</pallas_src>

<mosaic_0001>
module attributes {stable_mosaic.version = 11 : i64} {
  func.func @kernel(%arg0: i32, %arg1: memref<1x4x64xf32, #tpu.memory_space<vmem>>, %arg2: memref<1x4x256xf32, #tpu.memory_space<vmem>>, %arg3: memref<64x256xf32, #tpu.memory_space<vmem>>, %arg4: memref<4x72xf32, #tpu.memory_space<vmem>>, %arg5: memref<2x256xf32, #tpu.memory_space<vmem>>, %arg6: memref<1x4x256xf32, #tpu.memory_space<vmem>>, %arg7: memref<8x512xf32, #tpu.memory_space<vmem>>) attributes {dimension_semantics = [#tpu.dimension_semantics<parallel>], iteration_bounds = array<i64: 2>, scalar_prefetch = 0 : i64, scratch_operands = 1 : i64, tpu.core_type = #tpu.core_type<tc>, window_params = [{transform_indices = @transform_0, window_bounds = array<i64: 1, 4, 64>}, {transform_indices = @transform_1, window_bounds = array<i64: 1, 4, 256>}, {pipeline_mode = #tpu.pipeline_mode<synchronous>, transform_indices = @transform_2, window_bounds = array<i64: 64, 256>}, {pipeline_mode = #tpu.pipeline_mode<synchronous>, transform_indices = @transform_3, window_bounds = array<i64: 4, 72>}, {pipeline_mode = #tpu.pipeline_mode<synchronous>, transform_indices = @transform_4, window_bounds = array<i64: 2, 256>}, {transform_indices = @transform_5, window_bounds = array<i64: 1, 4, 256>}]} {
    %c0 = arith.constant 0 : index
    %c0_0 = arith.constant 0 : index
    %c0_1 = arith.constant 0 : index
    %0 = vector.load %arg1[%c0, %c0_0, %c0_1] : memref<1x4x64xf32, #tpu.memory_space<vmem>>, vector<1x4x64xf32>
    %1 = vector.shape_cast %0 : vector<1x4x64xf32> to vector<4x64xf32>
    %c0_2 = arith.constant 0 : index
    %c0_3 = arith.constant 0 : index
    %2 = vector.load %arg3[%c0_2, %c0_3] : memref<64x256xf32, #tpu.memory_space<vmem>>, vector<64x256xf32>
    %cst = arith.constant dense<0.000000e+00> : vector<4x256xf32>
    %3 = tpu.matmul %1, %2, %cst {dimension_numbers = #tpu.dot_dimension_numbers<[1], [0], [0], [1], [0, 0, 1, 1], [], []>} : vector<4x64xf32>, vector<64x256xf32>, vector<4x256xf32> -> vector<4x256xf32>
    %cst_4 = arith.constant 0.000000e+00 : f32
    %4 = vector.broadcast %cst_4 : f32 to vector<8x512xf32>
    %c0_5 = arith.constant 0 : index
    %c0_6 = arith.constant 0 : index
    %5 = vector.load %arg7[%c0_5, %c0_6] : memref<8x512xf32, #tpu.memory_space<vmem>>, vector<8x512xf32>
    tpu.vector_store %arg7[%c0_5, %c0_6], %4 {strides = array<i32>} : memref<8x512xf32, #tpu.memory_space<vmem>>, vector<8x512xf32>,
    %c0_7 = arith.constant 0 : index
    %c0_8 = arith.constant 0 : index
    %c0_9 = arith.constant 0 : index
    %6 = vector.load %arg2[%c0_7, %c0_8, %c0_9] : memref<1x4x256xf32, #tpu.memory_space<vmem>>, vector<1x4x256xf32>
    %7 = vector.shape_cast %6 : vector<1x4x256xf32> to vector<4x256xf32>
    %c0_10 = arith.constant 0 : index
    %c128 = arith.constant 128 : index
    %8 = vector.load %arg7[%c0_10, %c128] : memref<8x512xf32, #tpu.memory_space<vmem>>, vector<4x256xf32>
    tpu.vector_store %arg7[%c0_10, %c128], %7 {strides = array<i32>} : memref<8x512xf32, #tpu.memory_space<vmem>>, vector<4x256xf32>,
    %c4 = arith.constant 4 : index
    %c128_11 = arith.constant 128 : index
    %9 = vector.load %arg7[%c4, %c128_11] : memref<8x512xf32, #tpu.memory_space<vmem>>, vector<4x256xf32>
    tpu.vector_store %arg7[%c4, %c128_11], %3 {strides = array<i32>} : memref<8x512xf32, #tpu.memory_space<vmem>>, vector<4x256xf32>,
    %c0_12 = arith.constant 0 : index
    %c0_13 = arith.constant 0 : index
    %10 = vector.load %arg7[%c0_12, %c0_13] : memref<8x512xf32, #tpu.memory_space<vmem>>, vector<8x512xf32>
    %c0_14 = arith.constant 0 : index
    %c0_15 = arith.constant 0 : index
    %11 = vector.load %arg5[%c0_14, %c0_15] : memref<2x256xf32, #tpu.memory_space<vmem>>, vector<1x256xf32>
    %c1 = arith.constant 1 : index
    %c0_16 = arith.constant 0 : index
    %12 = vector.load %arg5[%c1, %c0_16] : memref<2x256xf32, #tpu.memory_space<vmem>>, vector<1x256xf32>
    %13 = vector.extract_strided_slice %10 {offsets = [0, 111], sizes = [8, 256], strides = [1, 1]} : vector<8x512xf32> to vector<8x256xf32>
    %14 = vector.broadcast %11 : vector<1x256xf32> to vector<8x256xf32>
    %15 = arith.mulf %13, %14 : vector<8x256xf32>
    %16 = vector.extract_strided_slice %10 {offsets = [0, 112], sizes = [8, 256], strides = [1, 1]} : vector<8x512xf32> to vector<8x256xf32>
    %17 = vector.extract_strided_slice %10 {offsets = [0, 113], sizes = [8, 256], strides = [1, 1]} : vector<8x512xf32> to vector<8x256xf32>
    %18 = vector.broadcast %12 : vector<1x256xf32> to vector<8x256xf32>
    %19 = arith.mulf %17, %18 : vector<8x256xf32>
    %20 = vector.extract_strided_slice %10 {offsets = [0, 127], sizes = [8, 256], strides = [1, 1]} : vector<8x512xf32> to vector<8x256xf32>
    %21 = vector.broadcast %11 : vector<1x256xf32> to vector<8x256xf32>
    %22 = arith.mulf %20, %21 : vector<8x256xf32>
    %23 = vector.extract_strided_slice %10 {offsets = [0, 128], sizes = [8, 256], strides = [1, 1]} : vector<8x512xf32> to vector<8x256xf32>
    %24 = vector.extract_strided_slice %10 {offsets = [0, 129], sizes = [8, 256], strides = [1, 1]} : vector<8x512xf32> to vector<8x256xf32>
    %25 = vector.broadcast %12 : vector<1x256xf32> to vector<8x256xf32>
    %26 = arith.mulf %24, %25 : vector<8x256xf32>
    %27 = vector.extract_strided_slice %10 {offsets = [0, 143], sizes = [8, 256], strides = [1, 1]} : vector<8x512xf32> to vector<8x256xf32>
    %28 = vector.broadcast %11 : vector<1x256xf32> to vector<8x256xf32>
    %29 = arith.mulf %27, %28 : vector<8x256xf32>
    %30 = vector.extract_strided_slice %10 {offsets = [0, 144], sizes = [8, 256], strides = [1, 1]} : vector<8x512xf32> to vector<8x256xf32>
    %31 = vector.extract_strided_slice %10 {offsets = [0, 145], sizes = [8, 256], strides = [1, 1]} : vector<8x512xf32> to vector<8x256xf32>
    %32 = vector.broadcast %12 : vector<1x256xf32> to vector<8x256xf32>
    %33 = arith.mulf %31, %32 : vector<8x256xf32>
    %34 = tpu.concatenate %15, %16, %19, %22, %23, %26, %29, %30, %33 in 0 : vector<8x256xf32>, vector<8x256xf32>, vector<8x256xf32>, vector<8x256xf32>, vector<8x256xf32>, vector<8x256xf32>, vector<8x256xf32>, vector<8x256xf32>, vector<8x256xf32> -> vector<72x256xf32>
    %c0_17 = arith.constant 0 : index
    %c0_18 = arith.constant 0 : index
    %35 = vector.load %arg4[%c0_17, %c0_18] : memref<4x72xf32, #tpu.memory_space<vmem>>, vector<4x72xf32>
    %cst_19 = arith.constant dense<0.000000e+00> : vector<4x256xf32>
    %36 = tpu.matmul %35, %34, %cst_19 {dimension_numbers = #tpu.dot_dimension_numbers<[1], [0], [0], [1], [0, 0, 1, 1], [], []>} : vector<4x72xf32>, vector<72x256xf32>, vector<4x256xf32> -> vector<4x256xf32>
    %cst_20 = arith.constant 0.000000e+00 : f32
    %37 = vector.broadcast %cst_20 : f32 to vector<4x256xf32>
    %38 = arith.maximumf %36, %37 : vector<4x256xf32>
    %c0_21 = arith.constant 0 : index
    %c0_22 = arith.constant 0 : index
    %c0_23 = arith.constant 0 : index
    %39 = vector.load %arg6[%c0_21, %c0_22, %c0_23] : memref<1x4x256xf32, #tpu.memory_space<vmem>>, vector<1x4x256xf32>
    %40 = vector.shape_cast %39 : vector<1x4x256xf32> to vector<4x256xf32>
    %41 = vector.shape_cast %38 : vector<4x256xf32> to vector<1x4x256xf32>
    tpu.vector_store %arg6[%c0_21, %c0_22, %c0_23], %41 {strides = array<i32>} : memref<1x4x256xf32, #tpu.memory_space<vmem>>, vector<1x4x256xf32>,
    return
  }
  func.func @transform_0(%arg0: i32) -> (i32, i32, i32) {
    %c0_i32 = arith.constant 0 : i32
    %c0_i32_0 = arith.constant 0 : i32
    %c0_i32_1 = arith.constant 0 : i32
    return %arg0, %c0_i32, %c0_i32_0 : i32, i32, i32
  }
  func.func @transform_1(%arg0: i32) -> (i32, i32, i32) {
    %c0_i32 = arith.constant 0 : i32
    %c0_i32_0 = arith.constant 0 : i32
    %c0_i32_1 = arith.constant 0 : i32
    return %arg0, %c0_i32, %c0_i32_0 : i32, i32, i32
  }
  func.func @transform_2(%arg0: i32) -> (i32, i32) {
    %c0_i32 = arith.constant 0 : i32
    %c0_i32_0 = arith.constant 0 : i32
    %c0_i32_1 = arith.constant 0 : i32
    return %c0_i32, %c0_i32_0 : i32, i32
  }
  func.func @transform_3(%arg0: i32) -> (i32, i32) {
    %c0_i32 = arith.constant 0 : i32
    %c0_i32_0 = arith.constant 0 : i32
    %c0_i32_1 = arith.constant 0 : i32
    return %c0_i32, %c0_i32_0 : i32, i32
  }
  func.func @transform_4(%arg0: i32) -> (i32, i32) {
    %c0_i32 = arith.constant 0 : i32
    %c0_i32_0 = arith.constant 0 : i32
    %c0_i32_1 = arith.constant 0 : i32
    return %c0_i32, %c0_i32_0 : i32, i32
  }
  func.func @transform_5(%arg0: i32) -> (i32, i32, i32) {
    %c0_i32 = arith.constant 0 : i32
    %c0_i32_0 = arith.constant 0 : i32
    %c0_i32_1 = arith.constant 0 : i32
    return %arg0, %c0_i32, %c0_i32_0 : i32, i32, i32
  }
}

</mosaic_0001>

<llo_original>
// kernel: tpu_custom_call.1
$region0: #{tpu_custom_call.1}
  #allocation0 [shape = 'u32[]', space=smem, size = 0x4, offset = 0x4, fixed_abs, tag = 'smem constant byte address 0x4 - core index']
  #allocation1 [shape = 'u32[144,128]{1,0:T(1,128)}', space=vmem, size = 0x12000, scoped, tag = 'internal scratch']
  #allocation2 [shape = 'f32[8,512]{1,0:T(8,128)}', space=vmem, size = 0x4000, scoped, tag = 'scratch operand']
  %s0 = inlined_call_operand.hbm [shape: f32[2,4,64], index: 0, kind: input, shape index: {}]
  %s1 = inlined_call_operand.hbm [shape: f32[2,4,256], index: 1, kind: input, shape index: {}]
  %s2 = inlined_call_operand.hbm [shape: f32[64,256], index: 2, kind: input, shape index: {}]
  %s3 = inlined_call_operand.vmem [shape: f32[4,72], index: 3, kind: input, shape index: {}]
  %s4 = inlined_call_operand.vmem [shape: f32[2,256], index: 4, kind: input, shape index: {}]
  %s5 = inlined_call_operand.hbm [shape: f32[2,4,256], index: 5, kind: output, shape index: {}]
  %s6 = sld [smem:[#allocation0]]
  $region65: #{tpu_custom_call.1} parent=0
    _
  %s8 = ssub.s32 1, %s6
  %s9 = scalar_select 0, %s8, %s6
  $region1: #{tpu_custom_call.1} parent=0
    #allocation3 [shape = 'u8[4096]{0}', space=vmem, size = 0x1000, scoped, tag = 'input window, operand 0']
    #allocation4 [shape = 's32[2]{0}', space=sflag, size = 0x8, scoped, tag = 'scoped memory for tpu_custom_call.1']
    #allocation5 [shape = 's32[2]{0}', space=sflag, size = 0x8, scoped, tag = 'scoped memory for tpu_custom_call.1']
    #allocation6 [shape = 'u8[8192]{0}', space=vmem, size = 0x2000, scoped, tag = 'input window, operand 1']
    #allocation7 [shape = 's32[2]{0}', space=sflag, size = 0x8, scoped, tag = 'scoped memory for tpu_custom_call.1']
    #allocation8 [shape = 'u8[65536]{0}', space=vmem, size = 0x10000, scoped, tag = 'input window, operand 2, single buffered']
    #allocation9 [shape = 'u8[8192]{0}', space=vmem, size = 0x2000, scoped, tag = 'output window, operand 0']
    %10 = vsyncpa [#allocation4], 0
    %s11 = scalar_lea.sflag [#allocation4], 1
    %12 = vsyncpa %s11, 0
    %13 = vsyncpa [#allocation7], 0
    %s14 = scalar_lea.sflag [#allocation7], 1
    %15 = vsyncpa %s14, 0
    %16 = vsyncpa [#allocation5], 0
    %s17 = scalar_lea.sflag [#allocation5], 1
    %18 = vsyncpa %s17, 0
    loop: start=0, step=1, limit=4
    $region2: #{tpu_custom_call.1} parent=1 // loop_pre_header
      _
    $region3: #{tpu_custom_call.1} parent=1 // loop_header
      %s20 = sphi 0, %s24
      %p21 = scmp.ge.s32.totalorder %s20, 4
      %s30 = sphi 0, %s32
      %s33 = sphi 0, %s30
      %s34 = sphi 0, %s33
      %s50 = sphi 0, %s34
      %s56 = sphi 0, %s58
      %s59 = sphi 0, %s56
      %s60 = sphi 0, %s59
      %s76 = sphi 0, %s60
      %s80 = sphi 0, %s80
      %s82 = sphi 0, %s80
      %s83 = sphi 0, %s82
      %s97 = sphi 0, %s83
      %s101 = sphi 0, %s101
      %s103 = sphi 0, %s101
      %s104 = sphi 0, %s103
      %s118 = sphi 0, %s104
      %s122 = sphi 0, %s122
      %s124 = sphi 0, %s122
      %s125 = sphi 0, %s124
      %s139 = sphi 0, %s125
      %s145 = sphi 0, %s147
      %s148 = sphi 0, %s145
      %s149 = sphi 0, %s148
      %s165 = sphi 0, %s149
    $region4: #{tpu_custom_call.1} parent=1 // loop_header_branch
      %23 = sbr.rel (%p21) target = $region8
    $region5: #{tpu_custom_call.1} parent=1 // loop_body
      %s25 = ssub.s32 %s20, 1
      %s26 = ssub.s32 %s20, 2
      %s27 = sadd.s32 %s20, 1
      %s28 = ssub.s32 %s20, %s27
      %p29 = scmp.eq.s32.totalorder %s28, 0
      %s31 = sadd.s32 %s30, 1
      %s32 = scalar_select %p29, %s30, %s31
      %p35 = pneg %p29
      %p36 = scmp.eq.s32.totalorder %s20, 1
      %p37 = por %p35, %p36
      %p38 = scmp.ne.s32.totalorder %s30, %s33
      %p39 = scmp.eq.s32.totalorder %s20, 0
      %p40 = por %p38, %p39
      %p41 = scmp.ne.s32.totalorder %s30, %s33
      %p42 = scmp.eq.s32.totalorder %s25, 1
      %p43 = por %p41, %p42
      %p44 = scmp.ne.s32.totalorder %s33, %s34
      %p45 = scmp.eq.s32.totalorder %s25, 0
      %p46 = por %p44, %p45
      %p47 = scmp.ne.s32.totalorder %s33, %s34
      %p48 = scmp.eq.s32.totalorder %s26, 1
      %p49 = por %p47, %p48
      %p51 = scmp.ne.s32.totalorder %s34, %s50
      %p52 = scmp.eq.s32.totalorder %s26, 0
      %p53 = por %p51, %p52
      %s54 = ssub.s32 %s20, %s27
      %p55 = scmp.eq.s32.totalorder %s54, 0
      %s57 = sadd.s32 %s56, 1
      %s58 = scalar_select %p55, %s56, %s57
      %p61 = pneg %p55
      %p62 = scmp.eq.s32.totalorder %s20, 1
      %p63 = por %p61, %p62
      %p64 = scmp.ne.s32.totalorder %s56, %s59
      %p65 = scmp.eq.s32.totalorder %s20, 0
      %p66 = por %p64, %p65
      %p67 = scmp.ne.s32.totalorder %s56, %s59
      %p68 = scmp.eq.s32.totalorder %s25, 1
      %p69 = por %p67, %p68
      %p70 = scmp.ne.s32.totalorder %s59, %s60
      %p71 = scmp.eq.s32.totalorder %s25, 0
      %p72 = por %p70, %p71
      %p73 = scmp.ne.s32.totalorder %s59, %s60
      %p74 = scmp.eq.s32.totalorder %s26, 1
      %p75 = por %p73, %p74
      %p77 = scmp.ne.s32.totalorder %s60, %s76
      %p78 = scmp.eq.s32.totalorder %s26, 0
      %p79 = por %p77, %p78
      %s81 = sadd.s32 %s80, 1
      %p84 = scmp.eq.s32.totalorder %s20, 1
      %p85 = scmp.ne.s32.totalorder %s80, %s82
      %p86 = scmp.eq.s32.totalorder %s20, 0
      %p87 = por %p85, %p86
      %p88 = scmp.ne.s32.totalorder %s80, %s82
      %p89 = scmp.eq.s32.totalorder %s25, 1
      %p90 = por %p88, %p89
      %p91 = scmp.ne.s32.totalorder %s82, %s83
      %p92 = scmp.eq.s32.totalorder %s25, 0
      %p93 = por %p91, %p92
      %p94 = scmp.ne.s32.totalorder %s82, %s83
      %p95 = scmp.eq.s32.totalorder %s26, 1
      %p96 = por %p94, %p95
      %p98 = scmp.ne.s32.totalorder %s83, %s97
      %p99 = scmp.eq.s32.totalorder %s26, 0
      %p100 = por %p98, %p99
      %s102 = sadd.s32 %s101, 1
      %p105 = scmp.eq.s32.totalorder %s20, 1
      %p106 = scmp.ne.s32.totalorder %s101, %s103
      %p107 = scmp.eq.s32.totalorder %s20, 0
      %p108 = por %p106, %p107
      %p109 = scmp.ne.s32.totalorder %s101, %s103
      %p110 = scmp.eq.s32.totalorder %s25, 1
      %p111 = por %p109, %p110
      %p112 = scmp.ne.s32.totalorder %s103, %s104
      %p113 = scmp.eq.s32.totalorder %s25, 0
      %p114 = por %p112, %p113
      %p115 = scmp.ne.s32.totalorder %s103, %s104
      %p116 = scmp.eq.s32.totalorder %s26, 1
      %p117 = por %p115, %p116
      %p119 = scmp.ne.s32.totalorder %s104, %s118
      %p120 = scmp.eq.s32.totalorder %s26, 0
      %p121 = por %p119, %p120
      %s123 = sadd.s32 %s122, 1
      %p126 = scmp.eq.s32.totalorder %s20, 1
      %p127 = scmp.ne.s32.totalorder %s122, %s124
      %p128 = scmp.eq.s32.totalorder %s20, 0
      %p129 = por %p127, %p128
      %p130 = scmp.ne.s32.totalorder %s122, %s124
      %p131 = scmp.eq.s32.totalorder %s25, 1
      %p132 = por %p130, %p131
      %p133 = scmp.ne.s32.totalorder %s124, %s125
      %p134 = scmp.eq.s32.totalorder %s25, 0
      %p135 = por %p133, %p134
      %p136 = scmp.ne.s32.totalorder %s124, %s125
      %p137 = scmp.eq.s32.totalorder %s26, 1
      %p138 = por %p136, %p137
      %p140 = scmp.ne.s32.totalorder %s125, %s139
      %p141 = scmp.eq.s32.totalorder %s26, 0
      %p142 = por %p140, %p141
      %s143 = ssub.s32 %s20, %s27
      %p144 = scmp.eq.s32.totalorder %s143, 0
      %s146 = sadd.s32 %s145, 1
      %s147 = scalar_select %p144, %s145, %s146
      %p150 = pneg %p144
      %p151 = scmp.eq.s32.totalorder %s20, 1
      %p152 = por %p150, %p151
      %p153 = scmp.ne.s32.totalorder %s145, %s148
      %p154 = scmp.eq.s32.totalorder %s20, 0
      %p155 = por %p153, %p154
      %p156 = scmp.ne.s32.totalorder %s145, %s148
      %p157 = scmp.eq.s32.totalorder %s25, 1
      %p158 = por %p156, %p157
      %p159 = scmp.ne.s32.totalorder %s148, %s149
      %p160 = scmp.eq.s32.totalorder %s25, 0
      %p161 = por %p159, %p160
      %p162 = scmp.ne.s32.totalorder %s148, %s149
      %p163 = scmp.eq.s32.totalorder %s26, 1
      %p164 = por %p162, %p163
      %p166 = scmp.ne.s32.totalorder %s149, %s165
      %p167 = scmp.eq.s32.totalorder %s26, 0
      %p168 = por %p166, %p167
      %p169 = scmp.le.s32.totalorder 1, %s20
      %p170 = scmp.lt.s32.totalorder %s20, 3
      %p171 = pnand %p169, %p170
      %p172 = pneg %p171
      // Predicated region
      $region9: #{tpu_custom_call.1} parent=5 // pred_check
        _
      $region10: #{tpu_custom_call.1} parent=5 // pred_check_branch
        %174 = sbr.rel (%p171) target = $region12
      $region11: #{tpu_custom_call.1} parent=5 // pred_region
        %s175 = ssub.s32 %s20, 1
        // Predicated region
        $region13: #{tpu_custom_call.1} parent=11 // pred_check
          %p176 = pneg %p93
        $region14: #{tpu_custom_call.1} parent=11 // pred_check_branch
          %178 = sbr.rel (%p176) target = $region16
        $region15: #{tpu_custom_call.1} parent=11 // pred_region
          %s180 = ssub.s32 2048, 2048
          %181 = vsyncadd [#allocation7], %s180
          %s182 = sshll.u32 [#allocation8], 4
          %s183 = int_to_ptr.vmem [resolvable:$true] %s182
          %188 = dma.hbm_to_vmem [thread:$0]  %s2, 2048, %s183, [#allocation7], 256, 256, 16
        $region16: #{tpu_custom_call.1} parent=11 // pred_fallthru
          _
        // Predicated region
        $region17: #{tpu_custom_call.1} parent=11 // pred_check
          %p189 = pneg %p114
        $region18: #{tpu_custom_call.1} parent=11 // pred_check_branch
          %191 = sbr.rel (%p189) target = $region20
        $region19: #{tpu_custom_call.1} parent=11 // pred_region
          _
        $region20: #{tpu_custom_call.1} parent=11 // pred_fallthru
          _
        // Predicated region
        $region21: #{tpu_custom_call.1} parent=11 // pred_check
          %p192 = pneg %p135
        $region22: #{tpu_custom_call.1} parent=11 // pred_check_branch
          %194 = sbr.rel (%p192) target = $region24
        $region23: #{tpu_custom_call.1} parent=11 // pred_region
          _
        $region24: #{tpu_custom_call.1} parent=11 // pred_fallthru
          _
      $region12: #{tpu_custom_call.1} parent=5 // pred_fallthru
        _
      %p195 = scmp.lt.s32.totalorder %s20, 2
      // Predicated region
      $region25: #{tpu_custom_call.1} parent=5 // pred_check
        %p196 = pneg %p195
      $region26: #{tpu_custom_call.1} parent=5 // pred_check_branch
        %198 = sbr.rel (%p196) target = $region28
      $region27: #{tpu_custom_call.1} parent=5 // pred_region
        // Predicated region
        $region29: #{tpu_custom_call.1} parent=27 // pred_check
          %p199 = pneg %p40
        $region30: #{tpu_custom_call.1} parent=27 // pred_check_branch
          %201 = sbr.rel (%p199) target = $region32
        $region31: #{tpu_custom_call.1} parent=27 // pred_region
          %s202 = sand.u32 %s30, 1
          %s203 = scalar_lea.sflag [#allocation4], %s202
          %s204 = sand.u32 %s30, 1
          %s205 = smul.addr %s204, 4
          %s206 = scalar_lea.vmem [#allocation3], %s205
          %s208 = ssub.s32 64, 64
          %209 = vsyncadd %s203, %s208
          %s210 = smul.addr %s20, 64
          %s211 = scalar_lea.hbm %s0, %s210
          %s213 = sshll.u32 %s206, 4
          %s214 = int_to_ptr.vmem [resolvable:$true] %s213
          %216 = dma.hbm_to_vmem [thread:$0]  %s211, 64, %s214, %s203
        $region32: #{tpu_custom_call.1} parent=27 // pred_fallthru
          _
        // Predicated region
        $region33: #{tpu_custom_call.1} parent=27 // pred_check
          %p217 = pneg %p66
        $region34: #{tpu_custom_call.1} parent=27 // pred_check_branch
          %219 = sbr.rel (%p217) target = $region36
        $region35: #{tpu_custom_call.1} parent=27 // pred_region
          %s220 = sand.u32 %s20, 1
          %s221 = scalar_lea.sflag [#allocation7], %s220
          %s222 = sand.u32 %s56, 1
          %s223 = smul.addr %s222, 8
          %s224 = scalar_lea.vmem [#allocation6], %s223
          %s226 = ssub.s32 128, 128
          %227 = vsyncadd %s221, %s226
          %s228 = smul.addr %s20, 2
          %s229 = smul.addr %s228, 64
          %s230 = scalar_lea.hbm %s1, %s229
          %s232 = sshll.u32 %s224, 4
          %s233 = int_to_ptr.vmem [resolvable:$true] %s232
          %235 = dma.hbm_to_vmem [thread:$0]  %s230, 128, %s233, %s221
        $region36: #{tpu_custom_call.1} parent=27 // pred_fallthru
          _
      $region28: #{tpu_custom_call.1} parent=5 // pred_fallthru
        _
      %p236 = scmp.le.s32.totalorder 1, %s20
      %p237 = scmp.lt.s32.totalorder %s20, 3
      %p238 = pnand %p236, %p237
      %p239 = pneg %p238
      // Predicated region
      $region37: #{tpu_custom_call.1} parent=5 // pred_check
        _
      $region38: #{tpu_custom_call.1} parent=5 // pred_check_branch
        %241 = sbr.rel (%p238) target = $region40
      $region39: #{tpu_custom_call.1} parent=5 // pred_region
        %s242 = ssub.s32 %s20, 1
        %s243 = sand.u32 %s33, 1
        %s244 = scalar_lea.sflag [#allocation4], %s243
        %s245 = sand.u32 %s33, 1
        %s246 = smul.addr %s245, 4
        %s247 = scalar_lea.vmem [#allocation3], %s246
        // Predicated region
        $region41: #{tpu_custom_call.1} parent=39 // pred_check
          %p248 = pneg %p46
        $region42: #{tpu_custom_call.1} parent=39 // pred_check_branch
          %250 = sbr.rel (%p248) target = $region44
        $region43: #{tpu_custom_call.1} parent=39 // pred_region
          %251 = dma.done %s244, 64
        $region44: #{tpu_custom_call.1} parent=39 // pred_fallthru
          _
        %s252 = sand.u32 %s25, 1
        %s253 = scalar_lea.sflag [#allocation7], %s252
        %s254 = sand.u32 %s59, 1
        %s255 = smul.addr %s254, 8
        %s256 = scalar_lea.vmem [#allocation6], %s255
        // Predicated region
        $region45: #{tpu_custom_call.1} parent=39 // pred_check
          %p257 = pneg %p72
        $region46: #{tpu_custom_call.1} parent=39 // pred_check_branch
          %259 = sbr.rel (%p257) target = $region48
        $region47: #{tpu_custom_call.1} parent=39 // pred_region
          %260 = dma.done %s253, 128
        $region48: #{tpu_custom_call.1} parent=39 // pred_fallthru
          _
        // Predicated region
        $region49: #{tpu_custom_call.1} parent=39 // pred_check
          %p261 = pneg %p93
        $region50: #{tpu_custom_call.1} parent=39 // pred_check_branch
          %263 = sbr.rel (%p261) target = $region52
        $region51: #{tpu_custom_call.1} parent=39 // pred_region
          %264 = dma.done [#allocation7], 2048
        $region52: #{tpu_custom_call.1} parent=39 // pred_fallthru
          _
        %s265 = sand.u32 %s33, 1
        %s266 = scalar_lea.sflag [#allocation4], %s265
        %s267 = sand.u32 %s33, 1
        %s268 = smul.addr %s267, 4
        %s269 = scalar_lea.vmem [#allocation3], %s268
        %p270 = pneg %p46
        %p271 = pneg %p43
        %s272 = sand.u32 %s25, 1
        %s273 = scalar_lea.sflag [#allocation7], %s272
        %s274 = sand.u32 %s59, 1
        %s275 = smul.addr %s274, 8
        %s276 = scalar_lea.vmem [#allocation6], %s275
        %p277 = pneg %p72
        %p278 = pneg %p69
        %p279 = pneg %p93
        %p280 = pneg %p90
        %p281 = pneg %p114
        %p282 = pneg %p111
        %p283 = pneg %p135
        %p284 = pneg %p132
        %p285 = pneg %p161
        %p286 = pneg %p158
        %s287 = sand.u32 %s148, 1
        %s288 = scalar_lea.sflag [#allocation5], %s287
        %s289 = sand.u32 %s148, 1
        %s290 = smul.addr %s289, 8
        %s291 = scalar_lea.vmem [#allocation9], %s290
        %v292 = vld [vmem:[%s247] sm:$0xf]
        %v293 = vld [vmem:[#allocation8] sm:$0xff]
        %v294 = vld [vmem:[#allocation8 + $0x8] sm:$0xff]
        %v295 = vld [vmem:[#allocation8 + $0x10] sm:$0xff]
        %v296 = vld [vmem:[#allocation8 + $0x18] sm:$0xff]
        %v297 = vld [vmem:[#allocation8 + $0x20] sm:$0xff]
        %v298 = vld [vmem:[#allocation8 + $0x28] sm:$0xff]
        %v299 = vld [vmem:[#allocation8 + $0x30] sm:$0xff]
        %v300 = vld [vmem:[#allocation8 + $0x38] sm:$0xff]
        %v301 = vld [vmem:[#allocation8 + $0x40] sm:$0xff]
        %v302 = vld [vmem:[#allocation8 + $0x48] sm:$0xff]
        %v303 = vld [vmem:[#allocation8 + $0x50] sm:$0xff]
        %v304 = vld [vmem:[#allocation8 + $0x58] sm:$0xff]
        %v305 = vld [vmem:[#allocation8 + $0x60] sm:$0xff]
        %v306 = vld [vmem:[#allocation8 + $0x68] sm:$0xff]
        %v307 = vld [vmem:[#allocation8 + $0x70] sm:$0xff]
        %v308 = vld [vmem:[#allocation8 + $0x78] sm:$0xff]
        %vm309 = vcmask 523264
        %v311 = vsel %vm309, %v292, 0
        %313 = vmatprep.subr.mxu0 %v294
        %314 = vmatpush1.msra.mxu0 %v293
        %315 = vmatprep.subr.mxu0 %v296
        %316 = vmatpush1.msra.mxu0 %v295
        %317 = vmatprep.subr.mxu0 %v298
        %318 = vmatpush1.msra.mxu0 %v297
        %319 = vmatprep.subr.mxu0 %v300
        %320 = vmatpush1.msra.mxu0 %v299
        %321 = vmatprep.subr.mxu0 %v302
        %322 = vmatpush1.msra.mxu0 %v301
        %323 = vmatprep.subr.mxu0 %v304
        %324 = vmatpush1.msra.mxu0 %v303
        %325 = vmatprep.subr.mxu0 %v306
        %326 = vmatpush1.msra.mxu0 %v305
        %327 = vmatprep.subr.mxu0 %v308
        %328 = vmatpush1.msra.mxu0 %v307
        %329 = vmatprep.subr.mxu0 0.0
        %330 = vmatpush1.msra.mxu0 0.0
        %331 = vmatprep.subr.mxu0 0.0
        %332 = vmatpush1.msra.mxu0 0.0
        %333 = vmatprep.subr.mxu0 0.0
        %334 = vmatpush1.msra.mxu0 0.0
        %335 = vmatprep.subr.mxu0 0.0
        %336 = vmatpush1.msra.mxu0 0.0
        %337 = vmatprep.subr.mxu0 0.0
        %338 = vmatpush1.msra.mxu0 0.0
        %339 = vmatprep.subr.mxu0 0.0
        %340 = vmatpush1.msra.mxu0 0.0
        %341 = vmatprep.subr.mxu0 0.0
        %342 = vmatpush1.msra.mxu0 0.0
        %343 = vmatprep.subr.mxu0 0.0
        %344 = vmatpush1.msra.mxu0 0.0
        %345 = vmatprep.subr.mxu0 0.0
        %346 = vmatpush1.msra.mxu0 0.0
        %347 = vmatprep.subr.mxu0 0.0
        %348 = vmatpush1.msra.mxu0 0.0
        %349 = vmatprep.subr.mxu0 0.0
        %350 = vmatpush1.msra.mxu0 0.0
        %351 = vmatprep.subr.mxu0 0.0
        %352 = vmatpush1.msra.mxu0 0.0
        %353 = vmatprep.subr.mxu0 0.0
        %354 = vmatpush1.msra.mxu0 0.0
        %355 = vmatprep.subr.mxu0 0.0
        %356 = vmatpush1.msra.mxu0 0.0
        %357 = vmatprep.subr.mxu0 0.0
        %358 = vmatpush1.msra.mxu0 0.0
        %359 = vmatprep.subr.mxu0 0.0
        %360 = vmatpush1.msra.mxu0 0.0
        %361 = vmatprep.subr.mxu0 0.0
        %362 = vmatpush1.msra.mxu0 0.0
        %363 = vmatprep.subr.mxu0 0.0
        %364 = vmatpush1.msra.mxu0 0.0
        %365 = vmatprep.subr.mxu0 0.0
        %366 = vmatpush1.msra.mxu0 0.0
        %367 = vmatprep.subr.mxu0 0.0
        %368 = vmatpush1.msra.mxu0 0.0
        %369 = vmatprep.subr.mxu0 0.0
        %370 = vmatpush1.msra.mxu0 0.0
        %371 = vmatprep.subr.mxu0 0.0
        %372 = vmatpush1.msra.mxu0 0.0
        %373 = vmatprep.subr.mxu0 0.0
        %374 = vmatpush1.msra.mxu0 0.0
        %375 = vmatprep.subr.mxu0 0.0
        %376 = vmatpush1.msra.mxu0 0.0
        %377 = vmatprep.mubr.f32.mxu0 0.0
        %378 = vmatmul.mubr.f32.gmra.mrb[0].mxu0 %v311
        %v379 = vpop.f32.mrb[0].mxu0
        %v380 = vadd.f32 0.0, %v379
        %v381 = vpop.f32.mrb[0].mxu0
        %v382 = vadd.f32 0.0, %v381
        %383 = vdwg.mxu0
        %384 = vst [vmem:[#allocation2] sm:$0xff] 0.0
        %385 = vst [vmem:[#allocation2 + $0x8] sm:$0xff] 0.0
        %386 = vst [vmem:[#allocation2 + $0x10] sm:$0xff] 0.0
        %387 = vst [vmem:[#allocation2 + $0x18] sm:$0xff] 0.0
        %v388 = vld [vmem:[%s256] sm:$0xff]
        %v390 = vcombine.high %v388, %v388
        %392 = vst [vmem:[#allocation2 + $0x8] sm:$0xf] %v388
        %393 = vst [vmem:[#allocation2 + $0x10] sm:$0xf] %v390
        %v396 = vrot.slane %v380, 4
        %v397 = vrot.slane %v382, 4
        %400 = vst [vmem:[#allocation2 + $0x8] sm:$0xf0] %v396
        %401 = vst [vmem:[#allocation2 + $0x10] sm:$0xf0] %v397
        %v402 = vld [vmem:[#allocation2] sm:$0xff]
        %v403 = vld [vmem:[#allocation2 + $0x8] sm:$0xff]
        %v404 = vld [vmem:[#allocation2 + $0x10] sm:$0xff]
        %v405 = vld [vmem:[#allocation2 + $0x18] sm:$0xff]
        %v406 = vld [vmem:[%s4] ss:$2 sm:$0x3]
        %s407 = scalar_lea.vmem %s4, 1
        %v408 = vld [vmem:[%s407] ss:$2 sm:$0x3]
        %v410 = vlaneseq
        %v411 = vshrl.u32 %v410, 7
        %v412 = vsub.s32 0, %v411
        %v413 = vrot.slane %v406, %v412
        %v414 = vlaneseq
        %v415 = vshrl.u32 %v414, 7
        %v416 = vsub.s32 1, %v415
        %v417 = vrot.slane %v406, %v416
        %418 = vrot.lane.b32.xlu0 %v413, 111
        %v419 = vpop.permute.xlu0 %418
        %420 = vrot.lane.b32.xlu0 %v417, 111
        %v421 = vpop.permute.xlu0 %420
        %vm422 = vcmask 908288
        %v423 = vsel %vm422, %v419, %v421
        %v427 = vmul.f32 %v402, %v419
        %v428 = vmul.f32 %v403, %v423
        %v429 = vmul.f32 %v404, %v421
        %v431 = vlaneseq
        %v432 = vshrl.u32 %v431, 7
        %v433 = vsub.s32 0, %v432
        %v434 = vrot.slane %v408, %v433
        %v435 = vlaneseq
        %v436 = vshrl.u32 %v435, 7
        %v437 = vsub.s32 1, %v436
        %v438 = vrot.slane %v408, %v437
        %439 = vrot.lane.b32.xlu0 %v434, 113
        %v440 = vpop.permute.xlu0 %439
        %441 = vrot.lane.b32.xlu0 %v438, 113
        %v442 = vpop.permute.xlu0 %441
        %vm443 = vcmask 924672
        %v444 = vsel %vm443, %v440, %v442
        %v448 = vmul.f32 %v402, %v440
        %v449 = vmul.f32 %v403, %v444
        %v450 = vmul.f32 %v404, %v442
        %451 = vrot.lane.b32.xlu0 %v413, 127
        %v452 = vpop.permute.xlu0 %451
        %453 = vrot.lane.b32.xlu0 %v417, 127
        %v454 = vpop.permute.xlu0 %453
        %vm455 = vcmask 1039360
        %v456 = vsel %vm455, %v452, %v454
        %v460 = vmul.f32 %v402, %v452
        %v461 = vmul.f32 %v403, %v456
        %v462 = vmul.f32 %v404, %v454
        %463 = vrot.lane.b32.xlu0 %v434, 1
        %v464 = vpop.permute.xlu0 %463
        %465 = vrot.lane.b32.xlu0 %v438, 1
        %v466 = vpop.permute.xlu0 %465
        %vm467 = vcmask 7168
        %v468 = vsel %vm467, %v464, %v466
        %v472 = vmul.f32 %v403, %v464
        %v473 = vmul.f32 %v404, %v468
        %v474 = vmul.f32 %v405, %v466
        %475 = vrot.lane.b32.xlu0 %v413, 15
        %v476 = vpop.permute.xlu0 %475
        %477 = vrot.lane.b32.xlu0 %v417, 15
        %v478 = vpop.permute.xlu0 %477
        %vm479 = vcmask 121856
        %v480 = vsel %vm479, %v476, %v478
        %v484 = vmul.f32 %v403, %v476
        %v485 = vmul.f32 %v404, %v480
        %v486 = vmul.f32 %v405, %v478
        %487 = vrot.lane.b32.xlu0 %v434, 17
        %v488 = vpop.permute.xlu0 %487
        %489 = vrot.lane.b32.xlu0 %v438, 17
        %v490 = vpop.permute.xlu0 %489
        %vm491 = vcmask 138240
        %v492 = vsel %vm491, %v488, %v490
        %v496 = vmul.f32 %v403, %v488
        %v497 = vmul.f32 %v404, %v492
        %v498 = vmul.f32 %v405, %v490
        %502 = vrot.lane.b32.xlu0 %v402, 127
        %v503 = vpop.permute.xlu0 %502
        %504 = vrot.lane.b32.xlu0 %v403, 127
        %v505 = vpop.permute.xlu0 %504
        %506 = vrot.lane.b32.xlu0 %v404, 127
        %v507 = vpop.permute.xlu0 %506
        %v508 = vsel %vm455, %v503, %v505
        %v509 = vsel %vm455, %v505, %v507
        %513 = vrot.lane.b32.xlu0 %v448, 126
        %v514 = vpop.permute.xlu0 %513
        %515 = vrot.lane.b32.xlu0 %v449, 126
        %v516 = vpop.permute.xlu0 %515
        %517 = vrot.lane.b32.xlu0 %v450, 126
        %v518 = vpop.permute.xlu0 %517
        %vm519 = vcmask 1031168
        %v520 = vsel %vm519, %v514, %v516
        %v521 = vsel %vm519, %v516, %v518
        %525 = vrot.lane.b32.xlu0 %v460, 112
        %v526 = vpop.permute.xlu0 %525
        %527 = vrot.lane.b32.xlu0 %v461, 112
        %v528 = vpop.permute.xlu0 %527
        %529 = vrot.lane.b32.xlu0 %v462, 112
        %v530 = vpop.permute.xlu0 %529
        %vm531 = vcmask 916480
        %v532 = vsel %vm531, %v526, %v528
        %v533 = vsel %vm531, %v528, %v530
        %534 = vrot.lane.b32.xlu0 %v403, 111
        %v535 = vpop.permute.xlu0 %534
        %536 = vrot.lane.b32.xlu0 %v404, 111
        %v537 = vpop.permute.xlu0 %536
        %v538 = vsel %vm422, %v535, %v537
        %542 = vrot.lane.b32.xlu0 %v472, 110
        %v543 = vpop.permute.xlu0 %542
        %544 = vrot.lane.b32.xlu0 %v473, 110
        %v545 = vpop.permute.xlu0 %544
        %546 = vrot.lane.b32.xlu0 %v474, 110
        %v547 = vpop.permute.xlu0 %546
        %vm548 = vcmask 900096
        %v549 = vsel %vm548, %v543, %v545
        %v550 = vsel %vm548, %v545, %v547
        %554 = vrot.lane.b32.xlu0 %v484, 96
        %v555 = vpop.permute.xlu0 %554
        %556 = vrot.lane.b32.xlu0 %v485, 96
        %v557 = vpop.permute.xlu0 %556
        %558 = vrot.lane.b32.xlu0 %v486, 96
        %v559 = vpop.permute.xlu0 %558
        %vm560 = vcmask 785408
        %v561 = vsel %vm560, %v555, %v557
        %v562 = vsel %vm560, %v557, %v559
        %564 = vrot.lane.b32.xlu0 %v403, 95
        %v565 = vpop.permute.xlu0 %564
        %566 = vrot.lane.b32.xlu0 %v404, 95
        %v567 = vpop.permute.xlu0 %566
        %568 = vrot.lane.b32.xlu0 %v405, 95
        %v569 = vpop.permute.xlu0 %568
        %vm570 = vcmask 777216
        %v571 = vsel %vm570, %v565, %v567
        %v572 = vsel %vm570, %v567, %v569
        %576 = vrot.lane.b32.xlu0 %v496, 94
        %v577 = vpop.permute.xlu0 %576
        %578 = vrot.lane.b32.xlu0 %v497, 94
        %v579 = vpop.permute.xlu0 %578
        %580 = vrot.lane.b32.xlu0 %v498, 94
        %v581 = vpop.permute.xlu0 %580
        %vm582 = vcmask 769024
        %v583 = vsel %vm582, %v577, %v579
        %v584 = vsel %vm582, %v579, %v581
        %v585 = vld [vmem:[%s3] sm:$0xf]
        %589 = vrot.lane.b32.xlu0 %v427, 17
        %v590 = vpop.permute.xlu0 %589
        %591 = vrot.lane.b32.xlu0 %v428, 17
        %v592 = vpop.permute.xlu0 %591
        %593 = vrot.lane.b32.xlu0 %v429, 17
        %v594 = vpop.permute.xlu0 %593
        %595 = vrot.lane.b32.xlu0 %v508, 17
        %v596 = vpop.permute.xlu0 %595
        %597 = vrot.lane.b32.xlu0 %v509, 17
        %v598 = vpop.permute.xlu0 %597
        %599 = vrot.lane.b32.xlu0 %v507, 17
        %v600 = vpop.permute.xlu0 %599
        %601 = vrot.lane.b32.xlu0 %v520, 17
        %v602 = vpop.permute.xlu0 %601
        %603 = vrot.lane.b32.xlu0 %v521, 17
        %v604 = vpop.permute.xlu0 %603
        %605 = vrot.lane.b32.xlu0 %v518, 17
        %v606 = vpop.permute.xlu0 %605
        %607 = vrot.lane.b32.xlu0 %v532, 17
        %v608 = vpop.permute.xlu0 %607
        %609 = vrot.lane.b32.xlu0 %v533, 17
        %v610 = vpop.permute.xlu0 %609
        %611 = vrot.lane.b32.xlu0 %v530, 17
        %v612 = vpop.permute.xlu0 %611
        %613 = vrot.lane.b32.xlu0 %v535, 17
        %v614 = vpop.permute.xlu0 %613
        %615 = vrot.lane.b32.xlu0 %v538, 17
        %v616 = vpop.permute.xlu0 %615
        %617 = vrot.lane.b32.xlu0 %v537, 17
        %v618 = vpop.permute.xlu0 %617
        %619 = vrot.lane.b32.xlu0 %v543, 17
        %v620 = vpop.permute.xlu0 %619
        %621 = vrot.lane.b32.xlu0 %v549, 17
        %v622 = vpop.permute.xlu0 %621
        %623 = vrot.lane.b32.xlu0 %v550, 17
        %v624 = vpop.permute.xlu0 %623
        %625 = vrot.lane.b32.xlu0 %v555, 17
        %v626 = vpop.permute.xlu0 %625
        %627 = vrot.lane.b32.xlu0 %v561, 17
        %v628 = vpop.permute.xlu0 %627
        %629 = vrot.lane.b32.xlu0 %v562, 17
        %v630 = vpop.permute.xlu0 %629
        %631 = vrot.lane.b32.xlu0 %v565, 17
        %v632 = vpop.permute.xlu0 %631
        %633 = vrot.lane.b32.xlu0 %v571, 17
        %v634 = vpop.permute.xlu0 %633
        %635 = vrot.lane.b32.xlu0 %v572, 17
        %v636 = vpop.permute.xlu0 %635
        %637 = vrot.lane.b32.xlu0 %v577, 17
        %v638 = vpop.permute.xlu0 %637
        %639 = vrot.lane.b32.xlu0 %v583, 17
        %v640 = vpop.permute.xlu0 %639
        %641 = vrot.lane.b32.xlu0 %v584, 17
        %v642 = vpop.permute.xlu0 %641
        %v643 = vsel %vm491, %v590, %v592
        %v644 = vsel %vm491, %v592, %v594
        %v645 = vsel %vm491, %v596, %v598
        %v646 = vsel %vm491, %v598, %v600
        %v647 = vsel %vm491, %v602, %v604
        %v648 = vsel %vm491, %v604, %v606
        %v649 = vsel %vm491, %v608, %v610
        %v650 = vsel %vm491, %v610, %v612
        %v651 = vsel %vm491, %v614, %v616
        %v652 = vsel %vm491, %v616, %v618
        %v653 = vsel %vm491, %v620, %v622
        %v654 = vsel %vm491, %v622, %v624
        %v655 = vsel %vm491, %v626, %v628
        %v656 = vsel %vm491, %v628, %v630
        %v657 = vsel %vm491, %v632, %v634
        %v658 = vsel %vm491, %v634, %v636
        %v659 = vsel %vm491, %v638, %v640
        %v660 = vsel %vm491, %v640, %v642
        %vm679 = vcmask 588800
        %v681 = vsel %vm679, %v585, 0
        %683 = vmatprep.subr.mxu0 %v644
        %684 = vmatpush1.msra.mxu0 %v643
        %685 = vmatprep.subr.mxu0 %v646
        %686 = vmatpush1.msra.mxu0 %v645
        %687 = vmatprep.subr.mxu0 %v648
        %688 = vmatpush1.msra.mxu0 %v647
        %689 = vmatprep.subr.mxu0 %v650
        %690 = vmatpush1.msra.mxu0 %v649
        %691 = vmatprep.subr.mxu0 %v652
        %692 = vmatpush1.msra.mxu0 %v651
        %693 = vmatprep.subr.mxu0 %v654
        %694 = vmatpush1.msra.mxu0 %v653
        %695 = vmatprep.subr.mxu0 %v656
        %696 = vmatpush1.msra.mxu0 %v655
        %697 = vmatprep.subr.mxu0 %v658
        %698 = vmatpush1.msra.mxu0 %v657
        %699 = vmatprep.subr.mxu0 %v660
        %700 = vmatpush1.msra.mxu0 %v659
        %701 = vmatprep.subr.mxu0 0.0
        %702 = vmatpush1.msra.mxu0 0.0
        %703 = vmatprep.subr.mxu0 0.0
        %704 = vmatpush1.msra.mxu0 0.0
        %705 = vmatprep.subr.mxu0 0.0
        %706 = vmatpush1.msra.mxu0 0.0
        %707 = vmatprep.subr.mxu0 0.0
        %708 = vmatpush1.msra.mxu0 0.0
        %709 = vmatprep.subr.mxu0 0.0
        %710 = vmatpush1.msra.mxu0 0.0
        %711 = vmatprep.subr.mxu0 0.0
        %712 = vmatpush1.msra.mxu0 0.0
        %713 = vmatprep.subr.mxu0 0.0
        %714 = vmatpush1.msra.mxu0 0.0
        %715 = vmatprep.subr.mxu0 0.0
        %716 = vmatpush1.msra.mxu0 0.0
        %717 = vmatprep.subr.mxu0 0.0
        %718 = vmatpush1.msra.mxu0 0.0
        %719 = vmatprep.subr.mxu0 0.0
        %720 = vmatpush1.msra.mxu0 0.0
        %721 = vmatprep.subr.mxu0 0.0
        %722 = vmatpush1.msra.mxu0 0.0
        %723 = vmatprep.subr.mxu0 0.0
        %724 = vmatpush1.msra.mxu0 0.0
        %725 = vmatprep.subr.mxu0 0.0
        %726 = vmatpush1.msra.mxu0 0.0
        %727 = vmatprep.subr.mxu0 0.0
        %728 = vmatpush1.msra.mxu0 0.0
        %729 = vmatprep.subr.mxu0 0.0
        %730 = vmatpush1.msra.mxu0 0.0
        %731 = vmatprep.subr.mxu0 0.0
        %732 = vmatpush1.msra.mxu0 0.0
        %733 = vmatprep.subr.mxu0 0.0
        %734 = vmatpush1.msra.mxu0 0.0
        %735 = vmatprep.subr.mxu0 0.0
        %736 = vmatpush1.msra.mxu0 0.0
        %737 = vmatprep.subr.mxu0 0.0
        %738 = vmatpush1.msra.mxu0 0.0
        %739 = vmatprep.subr.mxu0 0.0
        %740 = vmatpush1.msra.mxu0 0.0
        %741 = vmatprep.subr.mxu0 0.0
        %742 = vmatpush1.msra.mxu0 0.0
        %743 = vmatprep.subr.mxu0 0.0
        %744 = vmatpush1.msra.mxu0 0.0
        %745 = vmatprep.subr.mxu0 0.0
        %746 = vmatpush1.msra.mxu0 0.0
        %747 = vmatprep.mubr.f32.mxu0 0.0
        %748 = vmatmul.mubr.f32.gmra.mrb[0].mxu0 %v681
        %v749 = vpop.f32.mrb[0].mxu0
        %v750 = vadd.f32 0.0, %v749
        %v751 = vpop.f32.mrb[0].mxu0
        %v752 = vadd.f32 0.0, %v751
        %753 = vdwg.mxu0
        %v754 = vmax.f32 %v750, 0.0
        %v755 = vmax.f32 %v752, 0.0
        %v758 = vcombine.low %v754, %v755
        %760 = vst [vmem:[%s291] sm:$0xff] %v758
        %s761 = sand.u32 %s148, 1
        %s762 = scalar_lea.sflag [#allocation5], %s761
        %s763 = sand.u32 %s148, 1
        %s764 = smul.addr %s763, 8
        %s765 = scalar_lea.vmem [#allocation9], %s764
        // Predicated region
        $region53: #{tpu_custom_call.1} parent=39 // pred_check
          %p766 = pneg %p158
        $region54: #{tpu_custom_call.1} parent=39 // pred_check_branch
          %768 = sbr.rel (%p766) target = $region56
        $region55: #{tpu_custom_call.1} parent=39 // pred_region
          %s770 = ssub.s32 128, 128
          %771 = vsyncadd %s762, %s770
          %s772 = smul.addr %s25, 2
          %s773 = smul.addr %s772, 64
          %s774 = scalar_lea.hbm %s5, %s773
          %s776 = sshll.u32 %s765, 4
          %s777 = int_to_ptr.vmem [resolvable:$true] %s776
          %779 = dma.vmem_to_hbm [thread:$0]  %s777, 128, %s774, %s762
        $region56: #{tpu_custom_call.1} parent=39 // pred_fallthru
          _
      $region40: #{tpu_custom_call.1} parent=5 // pred_fallthru
        _
      %p780 = scmp.le.s32.totalorder 2, %s20
      // Predicated region
      $region57: #{tpu_custom_call.1} parent=5 // pred_check
        %p781 = pneg %p780
      $region58: #{tpu_custom_call.1} parent=5 // pred_check_branch
        %783 = sbr.rel (%p781) target = $region60
      $region59: #{tpu_custom_call.1} parent=5 // pred_region
        %s784 = ssub.s32 %s20, 2
        // Predicated region
        $region61: #{tpu_custom_call.1} parent=59 // pred_check
          %p785 = pneg %p164
        $region62: #{tpu_custom_call.1} parent=59 // pred_check_branch
          %787 = sbr.rel (%p785) target = $region64
        $region63: #{tpu_custom_call.1} parent=59 // pred_region
          %s788 = sand.u32 %s149, 1
          %s789 = scalar_lea.sflag [#allocation5], %s788
          %s790 = sand.u32 %s149, 1
          %s791 = smul.addr %s790, 8
          %s792 = scalar_lea.vmem [#allocation9], %s791
          %793 = dma.done %s789, 128
        $region64: #{tpu_custom_call.1} parent=59 // pred_fallthru
          _
      $region60: #{tpu_custom_call.1} parent=5 // pred_fallthru
        _
    $region6: #{tpu_custom_call.1} parent=1 // loop_footer
      %s24 = sadd.s32 1, %s20
    $region7: #{tpu_custom_call.1} parent=1 // loop_footer_branch
      %19 = sbr.rel target = $region3
    $region8: #{tpu_custom_call.1} parent=1 // loop_exit
      _
    %794 = vsyncpa [#allocation4], 1
    %s795 = scalar_lea.sflag [#allocation4], 1
    %796 = vsyncpa %s795, 1
    %797 = vsyncpa [#allocation7], 1
    %s798 = scalar_lea.sflag [#allocation7], 1
    %799 = vsyncpa %s798, 1
    %800 = vsyncpa [#allocation5], 1
    %s801 = scalar_lea.sflag [#allocation5], 1
    %802 = vsyncpa %s801, 1

</llo_original>
